<compile_context>
chip_gen: v7x
topology: tpu7x:2x2x1
jax: 0.10.0
libtpu: 0.0.40
codegen_flags: <defaults>
</compile_context>

<pallas_src>
import jax
import jax.numpy as jnp
from jax.experimental import pallas as pl
from jax.experimental.pallas import tpu as pltpu


def _se_kernel(x_ref, w1_ref, w2_ref, o_ref):
    # x_ref block: (Bt, C, HW) in the input dtype — native NCHW layout with
    # the spatial dims collapsed onto the 128-wide lane axis.
    x = x_ref[...]                                              # (Bt, C, HW)

    # ---- squeeze: spatial (lane-axis) sum with f32 accumulation.  The 1/HW
    # mean is folded into w1 by the wrapper.  Cross-lane reductions use the
    # XLU, which has huge slack here; if a bundle dump ever shows the vex
    # slot binding, switch this to a ones-row MXU matmul instead.
    pooled = jnp.sum(x.astype(jnp.float32), axis=2)             # (Bt, C) f32

    # ---- excitation: Linear -> ReLU -> Linear -> Sigmoid (tiny, f32, MXU) --
    h = jnp.dot(pooled, w1_ref[...], preferred_element_type=jnp.float32)  # (Bt, Cr)
    h = jnp.maximum(h, 0.0)
    s = jnp.dot(h, w2_ref[...], preferred_element_type=jnp.float32)       # (Bt, C)
    s = jax.nn.sigmoid(s)

    # ---- scale: per-(batch, channel) gate broadcast along the HW lanes,
    # multiplied in the input dtype (no second full-slab f32 copy for bf16).
    o_ref[...] = x * s[:, :, None].astype(x.dtype)


def _vmem_capacity_bytes():
    """Physical VMEM per core for the current chip (generation-aware tiling)."""
    try:
        return int(pltpu.get_tpu_info().vmem_capacity_bytes)
    except Exception:
        # Conservative default: v7x has the smallest VMEM (64 MiB / core).
        return 64 << 20


def _choose_batch_tile(B, per_image_bytes, budget_bytes):
    """Largest batch tile whose double-buffered in+out slabs fit `budget_bytes`.

    Caps the slab at ~4 MiB (beyond that the pipeline gains nothing) and
    prefers >= 2 grid steps so ("parallel",) can split across v7x's two
    TensorCores — but only once each slab is already >= ~512 KiB, so small
    problems are not sliced below the efficient-DMA regime.
    """
    bt = max(1, min(B, budget_bytes // max(1, 4 * per_image_bytes)))
    bt = max(1, min(bt, (4 << 20) // max(1, per_image_bytes)))
    if bt >= B and B > 1 and (B // 2) * per_image_bytes >= (512 << 10):
        bt = max(1, B // 2)
    # Use a divisor of B so every grid step is full and the split is balanced.
    while bt > 1 and B % bt:
        bt -= 1
    return bt


def se_layer(x, w1, w2):
    """x: (B, C, H, W) NCHW; w1: (C, C//r) == fc[0].weight.T; w2: (C//r, C) == fc[2].weight.T."""
    B, C, H, W = x.shape
    HW = H * W
    Cr = w1.shape[1]

    # Free reshape (collapses contiguous trailing dims) — no HBM transpose.
    x3 = x.reshape(B, C, HW)

    # Fold the 1/HW mean into w1; keep weights in f32 (excitation is tiny).
    # TODO(synk): on v7x with very large C, pass weights as bf16 and/or mark
    # their BlockSpecs pipeline_mode=pl.Buffered(1) to reclaim VMEM for a
    # larger batch tile.
    w1f = w1.astype(jnp.float32) * (1.0 / HW)
    w2f = w2.astype(jnp.float32)

    per_image_bytes = C * HW * x.dtype.itemsize
    weight_bytes = (w1f.size + w2f.size) * 4

    capacity = _vmem_capacity_bytes()
    usable = int(capacity * 0.8)                 # headroom for internal scratch
    budget = usable - 2 * weight_bytes - (2 << 20)
    if budget < 4 * per_image_bytes:
        # TODO(synk): two-phase (pool-then-scale) HW-tiled fallback for slabs
        # that do not fit a double-buffered pipeline (hits v7x's 64 MiB first).
        raise ValueError(
            f"SE slab C*HW = {C}x{HW} ({per_image_bytes} bytes/image) does not "
            f"fit the VMEM pipeline budget ({budget} bytes); HW-tiled fallback "
            f"not implemented.")

    Bt = _choose_batch_tile(B, per_image_bytes, budget)
    grid = B // Bt                               # Bt divides B by construction

    needed = 4 * Bt * per_image_bytes + 2 * weight_bytes + (2 << 20)
    vmem_limit = int(min(usable, max(needed, 16 << 20)))

    cost = pl.CostEstimate(
        flops=2 * B * C * HW + 4 * B * C * Cr,   # pool + scale + 2 matmuls
        transcendentals=B * C,                   # sigmoid
        bytes_accessed=2 * B * per_image_bytes + weight_bytes,
    )

    out3 = pl.pallas_call(
        _se_kernel,
        out_shape=jax.ShapeDtypeStruct((B, C, HW), x.dtype),
        grid_spec=pltpu.PrefetchScalarGridSpec(
            num_scalar_prefetch=0,
            grid=(grid,),
            in_specs=[
                pl.BlockSpec((Bt, C, HW), lambda b: (b, 0, 0)),
                pl.BlockSpec((C, Cr), lambda b: (0, 0)),
                pl.BlockSpec((Cr, C), lambda b: (0, 0)),
            ],
            out_specs=pl.BlockSpec((Bt, C, HW), lambda b: (b, 0, 0)),
        ),
        compiler_params=pltpu.CompilerParams(
            dimension_semantics=("parallel",),
            vmem_limit_bytes=vmem_limit),
        cost_estimate=cost,
    )(x3, w1f, w2f)

    return out3.reshape(B, C, H, W)


def se_layer_ref(x, w1, w2):
    """Pure-JAX reference mirroring the PyTorch module."""
    pooled = jnp.mean(x.astype(jnp.float32), axis=(2, 3))       # (B, C)
    h = jnp.maximum(pooled @ w1.astype(jnp.float32), 0.0)
    s = jax.nn.sigmoid(h @ w2.astype(jnp.float32))
    return (x.astype(jnp.float32) * s[:, :, None, None]).astype(x.dtype)


if __name__ == "__main__":
    root = jax.random.PRNGKey(0)

    def make_case(key, B, C, H, W, reduction, dtype):
        Cr = max(1, C // reduction)
        kx, k1, k2 = jax.random.split(key, 3)
        x = jax.random.normal(kx, (B, C, H, W), dtype=jnp.float32).astype(dtype)
        w1 = jax.random.normal(k1, (C, Cr), dtype=jnp.float32) * 0.1
        w2 = jax.random.normal(k2, (Cr, C), dtype=jnp.float32) * 0.1
        return x, w1, w2

    ka, kb = jax.random.split(root)

    # Case 1: lane-dense spatial (HW = 256), f32, even batch.
    x, w1, w2 = make_case(ka, 2, 128, 16, 16, 16, jnp.float32)
    out = se_layer(x, w1, w2)
    jax.block_until_ready(out)
    ref = se_layer_ref(x, w1, w2)
    assert out.shape == x.shape
    assert jnp.allclose(out, ref, atol=1e-5, rtol=1e-5), "f32 mismatch vs reference"

    # Case 2: non-multiple-of-128 spatial (HW = 49, masked stores), bf16
    # sublane packing, odd batch — exercises the paths the review flagged.
    xb, w1b, w2b = make_case(kb, 3, 64, 7, 7, 16, jnp.bfloat16)
    outb = se_layer(xb, w1b, w2b)
    jax.block_until_ready(outb)
    refb = se_layer_ref(xb, w1b, w2b)
    assert outb.shape == xb.shape
    assert jnp.allclose(outb.astype(jnp.float32), refb.astype(jnp.float32),
                        atol=3e-2, rtol=3e-2), "bf16 mismatch vs reference"

    print("KERNEL_OK")
</pallas_src>

<mosaic_0001>
module attributes {stable_mosaic.version = 11 : i64} {
  func.func @_se_kernel(%arg0: i32, %arg1: memref<2x128x256xf32, #tpu.memory_space<vmem>>, %arg2: memref<128x8xf32, #tpu.memory_space<vmem>>, %arg3: memref<8x128xf32, #tpu.memory_space<vmem>>, %arg4: memref<2x128x256xf32, #tpu.memory_space<vmem>>) attributes {dimension_semantics = [#tpu.dimension_semantics<parallel>], iteration_bounds = array<i64: 1>, scalar_prefetch = 0 : i64, scratch_operands = 0 : i64, tpu.core_type = #tpu.core_type<tc>, window_params = [{transform_indices = @transform_0, window_bounds = array<i64: 2, 128, 256>}, {pipeline_mode = #tpu.pipeline_mode<synchronous>, transform_indices = @transform_1, window_bounds = array<i64: 128, 8>}, {pipeline_mode = #tpu.pipeline_mode<synchronous>, transform_indices = @transform_2, window_bounds = array<i64: 8, 128>}, {transform_indices = @transform_3, window_bounds = array<i64: 2, 128, 256>}]} {
    %c0 = arith.constant 0 : index
    %c0_0 = arith.constant 0 : index
    %c0_1 = arith.constant 0 : index
    %0 = vector.load %arg1[%c0, %c0_0, %c0_1] : memref<2x128x256xf32, #tpu.memory_space<vmem>>, vector<2x128x256xf32>
    %cst = arith.constant dense<0.000000e+00> : vector<2x128xf32>
    %1 = vector.multi_reduction <add>, %0, %cst [2] : vector<2x128x256xf32> to vector<2x128xf32>
    %c0_2 = arith.constant 0 : index
    %c0_3 = arith.constant 0 : index
    %2 = vector.load %arg2[%c0_2, %c0_3] : memref<128x8xf32, #tpu.memory_space<vmem>>, vector<128x8xf32>
    %cst_4 = arith.constant dense<0.000000e+00> : vector<2x8xf32>
    %3 = tpu.matmul %1, %2, %cst_4 {dimension_numbers = #tpu.dot_dimension_numbers<[1], [0], [0], [1], [0, 0, 1, 1], [], []>} : vector<2x128xf32>, vector<128x8xf32>, vector<2x8xf32> -> vector<2x8xf32>
    %cst_5 = arith.constant 0.000000e+00 : f32
    %4 = vector.broadcast %cst_5 : f32 to vector<2x8xf32>
    %5 = arith.maximumf %3, %4 : vector<2x8xf32>
    %c0_6 = arith.constant 0 : index
    %c0_7 = arith.constant 0 : index
    %6 = vector.load %arg3[%c0_6, %c0_7] : memref<8x128xf32, #tpu.memory_space<vmem>>, vector<8x128xf32>
    %cst_8 = arith.constant dense<0.000000e+00> : vector<2x128xf32>
    %7 = tpu.matmul %5, %6, %cst_8 {dimension_numbers = #tpu.dot_dimension_numbers<[1], [0], [0], [1], [0, 0, 1, 1], [], []>} : vector<2x8xf32>, vector<8x128xf32>, vector<2x128xf32> -> vector<2x128xf32>
    %8 = arith.negf %7 : vector<2x128xf32>
    %9 = math.exp %8 : vector<2x128xf32>
    %cst_9 = arith.constant 1.000000e+00 : f32
    %10 = vector.broadcast %cst_9 : f32 to vector<2x128xf32>
    %11 = arith.addf %10, %9 : vector<2x128xf32>
    %12 = arith.divf %10, %11 : vector<2x128xf32>
    %13 = vector.shape_cast %12 : vector<2x128xf32> to vector<2x128x1xf32>
    %14 = vector.broadcast %13 : vector<2x128x1xf32> to vector<2x128x256xf32>
    %15 = arith.mulf %0, %14 : vector<2x128x256xf32>
    %c0_10 = arith.constant 0 : index
    %c0_11 = arith.constant 0 : index
    %c0_12 = arith.constant 0 : index
    %16 = vector.load %arg4[%c0_10, %c0_11, %c0_12] : memref<2x128x256xf32, #tpu.memory_space<vmem>>, vector<2x128x256xf32>
    tpu.vector_store %arg4[%c0_10, %c0_11, %c0_12], %15 {strides = array<i32>} : memref<2x128x256xf32, #tpu.memory_space<vmem>>, vector<2x128x256xf32>,
    return
  }
  func.func @transform_0(%arg0: i32) -> (i32, i32, i32) {
    %c0_i32 = arith.constant 0 : i32
    %c0_i32_0 = arith.constant 0 : i32
    %c0_i32_1 = arith.constant 0 : i32
    return %arg0, %c0_i32, %c0_i32_0 : i32, i32, i32
  }
  func.func @transform_1(%arg0: i32) -> (i32, i32) {
    %c0_i32 = arith.constant 0 : i32
    %c0_i32_0 = arith.constant 0 : i32
    %c0_i32_1 = arith.constant 0 : i32
    return %c0_i32, %c0_i32_0 : i32, i32
  }
  func.func @transform_2(%arg0: i32) -> (i32, i32) {
    %c0_i32 = arith.constant 0 : i32
    %c0_i32_0 = arith.constant 0 : i32
    %c0_i32_1 = arith.constant 0 : i32
    return %c0_i32, %c0_i32_0 : i32, i32
  }
  func.func @transform_3(%arg0: i32) -> (i32, i32, i32) {
    %c0_i32 = arith.constant 0 : i32
    %c0_i32_0 = arith.constant 0 : i32
    %c0_i32_1 = arith.constant 0 : i32
    return %arg0, %c0_i32, %c0_i32_0 : i32, i32, i32
  }
}

</mosaic_0001>

<llo_original>
// kernel: tpu_custom_call.1
$region0: #{tpu_custom_call.1}
  #allocation0 [shape = 'u32[]', space=smem, size = 0x4, offset = 0x4, fixed_abs, tag = 'smem constant byte address 0x4 - core index']
  #allocation1 [shape = 'u32[144,128]{1,0:T(1,128)}', space=vmem, size = 0x12000, scoped, tag = 'internal scratch']
  %s0 = inlined_call_operand.hbm [shape: f32[2,128,256], index: 0, kind: input, shape index: {}]
  %s1 = inlined_call_operand.vmem [shape: f32[128,8], index: 1, kind: input, shape index: {}]
  %s2 = inlined_call_operand.vmem [shape: f32[8,128], index: 2, kind: input, shape index: {}]
  %s3 = inlined_call_operand.hbm [shape: f32[2,128,256], index: 3, kind: output, shape index: {}]
  %s4 = sld [smem:[#allocation0]]
  $region26: #{tpu_custom_call.1} parent=0
    _
  %s6 = ssub.s32 1, %s4
  %s7 = scalar_select 0, %s6, %s4
  $region1: #{tpu_custom_call.1} parent=0
    #allocation2 [shape = 'u8[262144]{0}', space=vmem, size = 0x40000, scoped, tag = 'input window, operand 0, single buffered']
    #allocation3 [shape = 's32[1]{0}', space=sflag, size = 0x4, scoped, tag = 'scoped memory for tpu_custom_call.1']
    #allocation4 [shape = 's32[1]{0}', space=sflag, size = 0x4, scoped, tag = 'scoped memory for tpu_custom_call.1']
    #allocation5 [shape = 'u8[262144]{0}', space=vmem, size = 0x40000, scoped, tag = 'output window, operand 0, single buffered']
    %8 = vsyncpa [#allocation3], 0
    %9 = vsyncpa [#allocation4], 0
    // Predicated region
    $region2: #{tpu_custom_call.1} parent=1 // pred_check
      _
    $region3: #{tpu_custom_call.1} parent=1 // pred_check_branch
      %11 = sbr.rel (0) target = $region5
    $region4: #{tpu_custom_call.1} parent=1 // pred_region
      %s13 = ssub.s32 8192, 8192
      %14 = vsyncadd [#allocation3], %s13
      %s15 = sshll.u32 [#allocation2], 4
      %s16 = int_to_ptr.vmem [resolvable:$true] %s15
      %21 = dma.hbm_to_vmem [thread:$0]  %s0, 8192, %s16, [#allocation3], 256, 256, 16
    $region5: #{tpu_custom_call.1} parent=1 // pred_fallthru
      _
    // Predicated region
    $region6: #{tpu_custom_call.1} parent=1 // pred_check
      _
    $region7: #{tpu_custom_call.1} parent=1 // pred_check_branch
      %23 = sbr.rel (0) target = $region9
    $region8: #{tpu_custom_call.1} parent=1 // pred_region
      _
    $region9: #{tpu_custom_call.1} parent=1 // pred_fallthru
      _
    // Predicated region
    $region10: #{tpu_custom_call.1} parent=1 // pred_check
      _
    $region11: #{tpu_custom_call.1} parent=1 // pred_check_branch
      %25 = sbr.rel (0) target = $region13
    $region12: #{tpu_custom_call.1} parent=1 // pred_region
      _
    $region13: #{tpu_custom_call.1} parent=1 // pred_fallthru
      _
    // Predicated region
    $region14: #{tpu_custom_call.1} parent=1 // pred_check
      _
    $region15: #{tpu_custom_call.1} parent=1 // pred_check_branch
      %27 = sbr.rel (0) target = $region17
    $region16: #{tpu_custom_call.1} parent=1 // pred_region
      %28 = dma.done [#allocation3], 8192
    $region17: #{tpu_custom_call.1} parent=1 // pred_fallthru
      _
    %v29 = vld [vmem:[#allocation2] sm:$0xff]
    %v30 = vld [vmem:[#allocation2 + $0x8] sm:$0xff]
    %v31 = vld [vmem:[#allocation2 + $0x10] sm:$0xff]
    %v32 = vld [vmem:[#allocation2 + $0x18] sm:$0xff]
    %v33 = vld [vmem:[#allocation2 + $0x20] sm:$0xff]
    %v34 = vld [vmem:[#allocation2 + $0x28] sm:$0xff]
    %v35 = vld [vmem:[#allocation2 + $0x30] sm:$0xff]
    %v36 = vld [vmem:[#allocation2 + $0x38] sm:$0xff]
    %v37 = vld [vmem:[#allocation2 + $0x40] sm:$0xff]
    %v38 = vld [vmem:[#allocation2 + $0x48] sm:$0xff]
    %v39 = vld [vmem:[#allocation2 + $0x50] sm:$0xff]
    %v40 = vld [vmem:[#allocation2 + $0x58] sm:$0xff]
    %v41 = vld [vmem:[#allocation2 + $0x60] sm:$0xff]
    %v42 = vld [vmem:[#allocation2 + $0x68] sm:$0xff]
    %v43 = vld [vmem:[#allocation2 + $0x70] sm:$0xff]
    %v44 = vld [vmem:[#allocation2 + $0x78] sm:$0xff]
    %v45 = vld [vmem:[#allocation2 + $0x80] sm:$0xff]
    %v46 = vld [vmem:[#allocation2 + $0x88] sm:$0xff]
    %v47 = vld [vmem:[#allocation2 + $0x90] sm:$0xff]
    %v48 = vld [vmem:[#allocation2 + $0x98] sm:$0xff]
    %v49 = vld [vmem:[#allocation2 + $0xa0] sm:$0xff]
    %v50 = vld [vmem:[#allocation2 + $0xa8] sm:$0xff]
    %v51 = vld [vmem:[#allocation2 + $0xb0] sm:$0xff]
    %v52 = vld [vmem:[#allocation2 + $0xb8] sm:$0xff]
    %v53 = vld [vmem:[#allocation2 + $0xc0] sm:$0xff]
    %v54 = vld [vmem:[#allocation2 + $0xc8] sm:$0xff]
    %v55 = vld [vmem:[#allocation2 + $0xd0] sm:$0xff]
    %v56 = vld [vmem:[#allocation2 + $0xd8] sm:$0xff]
    %v57 = vld [vmem:[#allocation2 + $0xe0] sm:$0xff]
    %v58 = vld [vmem:[#allocation2 + $0xe8] sm:$0xff]
    %v59 = vld [vmem:[#allocation2 + $0xf0] sm:$0xff]
    %v60 = vld [vmem:[#allocation2 + $0xf8] sm:$0xff]
    %v61 = vld [vmem:[#allocation2 + $0x100] sm:$0xff]
    %v62 = vld [vmem:[#allocation2 + $0x108] sm:$0xff]
    %v63 = vld [vmem:[#allocation2 + $0x110] sm:$0xff]
    %v64 = vld [vmem:[#allocation2 + $0x118] sm:$0xff]
    %v65 = vld [vmem:[#allocation2 + $0x120] sm:$0xff]
    %v66 = vld [vmem:[#allocation2 + $0x128] sm:$0xff]
    %v67 = vld [vmem:[#allocation2 + $0x130] sm:$0xff]
    %v68 = vld [vmem:[#allocation2 + $0x138] sm:$0xff]
    %v69 = vld [vmem:[#allocation2 + $0x140] sm:$0xff]
    %v70 = vld [vmem:[#allocation2 + $0x148] sm:$0xff]
    %v71 = vld [vmem:[#allocation2 + $0x150] sm:$0xff]
    %v72 = vld [vmem:[#allocation2 + $0x158] sm:$0xff]
    %v73 = vld [vmem:[#allocation2 + $0x160] sm:$0xff]
    %v74 = vld [vmem:[#allocation2 + $0x168] sm:$0xff]
    %v75 = vld [vmem:[#allocation2 + $0x170] sm:$0xff]
    %v76 = vld [vmem:[#allocation2 + $0x178] sm:$0xff]
    %v77 = vld [vmem:[#allocation2 + $0x180] sm:$0xff]
    %v78 = vld [vmem:[#allocation2 + $0x188] sm:$0xff]
    %v79 = vld [vmem:[#allocation2 + $0x190] sm:$0xff]
    %v80 = vld [vmem:[#allocation2 + $0x198] sm:$0xff]
    %v81 = vld [vmem:[#allocation2 + $0x1a0] sm:$0xff]
    %v82 = vld [vmem:[#allocation2 + $0x1a8] sm:$0xff]
    %v83 = vld [vmem:[#allocation2 + $0x1b0] sm:$0xff]
    %v84 = vld [vmem:[#allocation2 + $0x1b8] sm:$0xff]
    %v85 = vld [vmem:[#allocation2 + $0x1c0] sm:$0xff]
    %v86 = vld [vmem:[#allocation2 + $0x1c8] sm:$0xff]
    %v87 = vld [vmem:[#allocation2 + $0x1d0] sm:$0xff]
    %v88 = vld [vmem:[#allocation2 + $0x1d8] sm:$0xff]
    %v89 = vld [vmem:[#allocation2 + $0x1e0] sm:$0xff]
    %v90 = vld [vmem:[#allocation2 + $0x1e8] sm:$0xff]
    %v91 = vld [vmem:[#allocation2 + $0x1f0] sm:$0xff]
    %v92 = vld [vmem:[#allocation2 + $0x1f8] sm:$0xff]
    %v93 = vadd.f32 %v29, %v30
    %94 = vadd.xlane.f32.xlu0 %v93
    %v95 = vpop.xlane.xlu0 %94
    %v96 = vadd.f32 %v31, %v32
    %97 = vadd.xlane.f32.xlu0 %v96
    %v98 = vpop.xlane.xlu0 %97
    %v99 = vadd.f32 %v33, %v34
    %100 = vadd.xlane.f32.xlu0 %v99
    %v101 = vpop.xlane.xlu0 %100
    %v102 = vadd.f32 %v35, %v36
    %103 = vadd.xlane.f32.xlu0 %v102
    %v104 = vpop.xlane.xlu0 %103
    %v105 = vadd.f32 %v37, %v38
    %106 = vadd.xlane.f32.xlu0 %v105
    %v107 = vpop.xlane.xlu0 %106
    %v108 = vadd.f32 %v39, %v40
    %109 = vadd.xlane.f32.xlu0 %v108
    %v110 = vpop.xlane.xlu0 %109
    %v111 = vadd.f32 %v41, %v42
    %112 = vadd.xlane.f32.xlu0 %v111
    %v113 = vpop.xlane.xlu0 %112
    %v114 = vadd.f32 %v43, %v44
    %115 = vadd.xlane.f32.xlu0 %v114
    %v116 = vpop.xlane.xlu0 %115
    %v117 = vadd.f32 %v45, %v46
    %118 = vadd.xlane.f32.xlu0 %v117
    %v119 = vpop.xlane.xlu0 %118
    %v120 = vadd.f32 %v47, %v48
    %121 = vadd.xlane.f32.xlu0 %v120
    %v122 = vpop.xlane.xlu0 %121
    %v123 = vadd.f32 %v49, %v50
    %124 = vadd.xlane.f32.xlu0 %v123
    %v125 = vpop.xlane.xlu0 %124
    %v126 = vadd.f32 %v51, %v52
    %127 = vadd.xlane.f32.xlu0 %v126
    %v128 = vpop.xlane.xlu0 %127
    %v129 = vadd.f32 %v53, %v54
    %130 = vadd.xlane.f32.xlu0 %v129
    %v131 = vpop.xlane.xlu0 %130
    %v132 = vadd.f32 %v55, %v56
    %133 = vadd.xlane.f32.xlu0 %v132
    %v134 = vpop.xlane.xlu0 %133
    %v135 = vadd.f32 %v57, %v58
    %136 = vadd.xlane.f32.xlu0 %v135
    %v137 = vpop.xlane.xlu0 %136
    %v138 = vadd.f32 %v59, %v60
    %139 = vadd.xlane.f32.xlu0 %v138
    %v140 = vpop.xlane.xlu0 %139
    %v141 = vadd.f32 %v61, %v62
    %142 = vadd.xlane.f32.xlu0 %v141
    %v143 = vpop.xlane.xlu0 %142
    %v144 = vadd.f32 %v63, %v64
    %145 = vadd.xlane.f32.xlu0 %v144
    %v146 = vpop.xlane.xlu0 %145
    %v147 = vadd.f32 %v65, %v66
    %148 = vadd.xlane.f32.xlu0 %v147
    %v149 = vpop.xlane.xlu0 %148
    %v150 = vadd.f32 %v67, %v68
    %151 = vadd.xlane.f32.xlu0 %v150
    %v152 = vpop.xlane.xlu0 %151
    %v153 = vadd.f32 %v69, %v70
    %154 = vadd.xlane.f32.xlu0 %v153
    %v155 = vpop.xlane.xlu0 %154
    %v156 = vadd.f32 %v71, %v72
    %157 = vadd.xlane.f32.xlu0 %v156
    %v158 = vpop.xlane.xlu0 %157
    %v159 = vadd.f32 %v73, %v74
    %160 = vadd.xlane.f32.xlu0 %v159
    %v161 = vpop.xlane.xlu0 %160
    %v162 = vadd.f32 %v75, %v76
    %163 = vadd.xlane.f32.xlu0 %v162
    %v164 = vpop.xlane.xlu0 %163
    %v165 = vadd.f32 %v77, %v78
    %166 = vadd.xlane.f32.xlu0 %v165
    %v167 = vpop.xlane.xlu0 %166
    %v168 = vadd.f32 %v79, %v80
    %169 = vadd.xlane.f32.xlu0 %v168
    %v170 = vpop.xlane.xlu0 %169
    %v171 = vadd.f32 %v81, %v82
    %172 = vadd.xlane.f32.xlu0 %v171
    %v173 = vpop.xlane.xlu0 %172
    %v174 = vadd.f32 %v83, %v84
    %175 = vadd.xlane.f32.xlu0 %v174
    %v176 = vpop.xlane.xlu0 %175
    %v177 = vadd.f32 %v85, %v86
    %178 = vadd.xlane.f32.xlu0 %v177
    %v179 = vpop.xlane.xlu0 %178
    %v180 = vadd.f32 %v87, %v88
    %181 = vadd.xlane.f32.xlu0 %v180
    %v182 = vpop.xlane.xlu0 %181
    %v183 = vadd.f32 %v89, %v90
    %184 = vadd.xlane.f32.xlu0 %v183
    %v185 = vpop.xlane.xlu0 %184
    %v186 = vadd.f32 %v91, %v92
    %187 = vadd.xlane.f32.xlu0 %v186
    %v188 = vpop.xlane.xlu0 %187
    %v189 = vld [vmem:[%s1] sm:$0xff]
    %v190 = vld [vmem:[%s1 + $0x8] sm:$0xff]
    %v191 = vld [vmem:[%s1 + $0x10] sm:$0xff]
    %v192 = vld [vmem:[%s1 + $0x18] sm:$0xff]
    %v193 = vld [vmem:[%s1 + $0x20] sm:$0xff]
    %v194 = vld [vmem:[%s1 + $0x28] sm:$0xff]
    %v195 = vld [vmem:[%s1 + $0x30] sm:$0xff]
    %v196 = vld [vmem:[%s1 + $0x38] sm:$0xff]
    %v197 = vld [vmem:[%s1 + $0x40] sm:$0xff]
    %v198 = vld [vmem:[%s1 + $0x48] sm:$0xff]
    %v199 = vld [vmem:[%s1 + $0x50] sm:$0xff]
    %v200 = vld [vmem:[%s1 + $0x58] sm:$0xff]
    %v201 = vld [vmem:[%s1 + $0x60] sm:$0xff]
    %v202 = vld [vmem:[%s1 + $0x68] sm:$0xff]
    %v203 = vld [vmem:[%s1 + $0x70] sm:$0xff]
    %v204 = vld [vmem:[%s1 + $0x78] sm:$0xff]
    %v237 = vlaneseq
    %v238 = vand.u32 %v237, 127
    %v239 = vlaneseq
    %v240 = vshrl.u32 %v239, 7
    %v241 = vsub.s32 %v238, %v240
    %v242 = vrot.slane %v95, %v241
    %v243 = vadd.s32 %v238, 4294967288
    %v244 = vlaneseq
    %v245 = vshrl.u32 %v244, 7
    %v246 = vsub.s32 %v243, %v245
    %v247 = vrot.slane %v98, %v246
    %vm248 = vcmask 130112
    %v249 = vsel %vm248, %v247, %v242
    %v250 = vadd.s32 %v238, 4294967280
    %v251 = vlaneseq
    %v252 = vshrl.u32 %v251, 7
    %v253 = vsub.s32 %v250, %v252
    %v254 = vrot.slane %v101, %v253
    %vm255 = vcmask 195712
    %v256 = vsel %vm255, %v254, %v249
    %v257 = vadd.s32 %v238, 4294967272
    %v258 = vlaneseq
    %v259 = vshrl.u32 %v258, 7
    %v260 = vsub.s32 %v257, %v259
    %v261 = vrot.slane %v104, %v260
    %vm262 = vcmask 261312
    %v263 = vsel %vm262, %v261, %v256
    %v264 = vadd.s32 %v238, 4294967264
    %v265 = vlaneseq
    %v266 = vshrl.u32 %v265, 7
    %v267 = vsub.s32 %v264, %v266
    %v268 = vrot.slane %v107, %v267
    %vm269 = vcmask 326912
    %v270 = vsel %vm269, %v268, %v263
    %v271 = vadd.s32 %v238, 4294967256
    %v272 = vlaneseq
    %v273 = vshrl.u32 %v272, 7
    %v274 = vsub.s32 %v271, %v273
    %v275 = vrot.slane %v110, %v274
    %vm276 = vcmask 392512
    %v277 = vsel %vm276, %v275, %v270
    %v278 = vadd.s32 %v238, 4294967248
    %v279 = vlaneseq
    %v280 = vshrl.u32 %v279, 7
    %v281 = vsub.s32 %v278, %v280
    %v282 = vrot.slane %v113, %v281
    %vm283 = vcmask 458112
    %v284 = vsel %vm283, %v282, %v277
    %v285 = vadd.s32 %v238, 4294967240
    %v286 = vlaneseq
    %v287 = vshrl.u32 %v286, 7
    %v288 = vsub.s32 %v285, %v287
    %v289 = vrot.slane %v116, %v288
    %vm290 = vcmask 523712
    %v291 = vsel %vm290, %v289, %v284
    %v292 = vadd.s32 %v238, 4294967232
    %v293 = vlaneseq
    %v294 = vshrl.u32 %v293, 7
    %v295 = vsub.s32 %v292, %v294
    %v296 = vrot.slane %v119, %v295
    %vm297 = vcmask 589312
    %v298 = vsel %vm297, %v296, %v291
    %v299 = vadd.s32 %v238, 4294967224
    %v300 = vlaneseq
    %v301 = vshrl.u32 %v300, 7
    %v302 = vsub.s32 %v299, %v301
    %v303 = vrot.slane %v122, %v302
    %vm304 = vcmask 654912
    %v305 = vsel %vm304, %v303, %v298
    %v306 = vadd.s32 %v238, 4294967216
    %v307 = vlaneseq
    %v308 = vshrl.u32 %v307, 7
    %v309 = vsub.s32 %v306, %v308
    %v310 = vrot.slane %v125, %v309
    %vm311 = vcmask 720512
    %v312 = vsel %vm311, %v310, %v305
    %v313 = vadd.s32 %v238, 4294967208
    %v314 = vlaneseq
    %v315 = vshrl.u32 %v314, 7
    %v316 = vsub.s32 %v313, %v315
    %v317 = vrot.slane %v128, %v316
    %vm318 = vcmask 786112
    %v319 = vsel %vm318, %v317, %v312
    %v320 = vadd.s32 %v238, 4294967200
    %v321 = vlaneseq
    %v322 = vshrl.u32 %v321, 7
    %v323 = vsub.s32 %v320, %v322
    %v324 = vrot.slane %v131, %v323
    %vm325 = vcmask 851712
    %v326 = vsel %vm325, %v324, %v319
    %v327 = vadd.s32 %v238, 4294967192
    %v328 = vlaneseq
    %v329 = vshrl.u32 %v328, 7
    %v330 = vsub.s32 %v327, %v329
    %v331 = vrot.slane %v134, %v330
    %vm332 = vcmask 917312
    %v333 = vsel %vm332, %v331, %v326
    %v334 = vadd.s32 %v238, 4294967184
    %v335 = vlaneseq
    %v336 = vshrl.u32 %v335, 7
    %v337 = vsub.s32 %v334, %v336
    %v338 = vrot.slane %v137, %v337
    %vm339 = vcmask 982912
    %v340 = vsel %vm339, %v338, %v333
    %v341 = vadd.s32 %v238, 4294967176
    %v342 = vlaneseq
    %v343 = vshrl.u32 %v342, 7
    %v344 = vsub.s32 %v341, %v343
    %v345 = vrot.slane %v140, %v344
    %vm346 = vcmask 1048512
    %v347 = vsel %vm346, %v345, %v340
    %v348 = vlaneseq
    %v349 = vshrl.u32 %v348, 7
    %v350 = vsub.s32 %v238, %v349
    %v351 = vrot.slane %v143, %v350
    %v352 = vlaneseq
    %v353 = vshrl.u32 %v352, 7
    %v354 = vsub.s32 %v243, %v353
    %v355 = vrot.slane %v146, %v354
    %v356 = vsel %vm248, %v355, %v351
    %v357 = vlaneseq
    %v358 = vshrl.u32 %v357, 7
    %v359 = vsub.s32 %v250, %v358
    %v360 = vrot.slane %v149, %v359
    %v361 = vsel %vm255, %v360, %v356
    %v362 = vlaneseq
    %v363 = vshrl.u32 %v362, 7
    %v364 = vsub.s32 %v257, %v363
    %v365 = vrot.slane %v152, %v364
    %v366 = vsel %vm262, %v365, %v361
    %v367 = vlaneseq
    %v368 = vshrl.u32 %v367, 7
    %v369 = vsub.s32 %v264, %v368
    %v370 = vrot.slane %v155, %v369
    %v371 = vsel %vm269, %v370, %v366
    %v372 = vlaneseq
    %v373 = vshrl.u32 %v372, 7
    %v374 = vsub.s32 %v271, %v373
    %v375 = vrot.slane %v158, %v374
    %v376 = vsel %vm276, %v375, %v371
    %v377 = vlaneseq
    %v378 = vshrl.u32 %v377, 7
    %v379 = vsub.s32 %v278, %v378
    %v380 = vrot.slane %v161, %v379
    %v381 = vsel %vm283, %v380, %v376
    %v382 = vlaneseq
    %v383 = vshrl.u32 %v382, 7
    %v384 = vsub.s32 %v285, %v383
    %v385 = vrot.slane %v164, %v384
    %v386 = vsel %vm290, %v385, %v381
    %v387 = vlaneseq
    %v388 = vshrl.u32 %v387, 7
    %v389 = vsub.s32 %v292, %v388
    %v390 = vrot.slane %v167, %v389
    %v391 = vsel %vm297, %v390, %v386
    %v392 = vlaneseq
    %v393 = vshrl.u32 %v392, 7
    %v394 = vsub.s32 %v299, %v393
    %v395 = vrot.slane %v170, %v394
    %v396 = vsel %vm304, %v395, %v391
    %v397 = vlaneseq
    %v398 = vshrl.u32 %v397, 7
    %v399 = vsub.s32 %v306, %v398
    %v400 = vrot.slane %v173, %v399
    %v401 = vsel %vm311, %v400, %v396
    %v402 = vlaneseq
    %v403 = vshrl.u32 %v402, 7
    %v404 = vsub.s32 %v313, %v403
    %v405 = vrot.slane %v176, %v404
    %v406 = vsel %vm318, %v405, %v401
    %v407 = vlaneseq
    %v408 = vshrl.u32 %v407, 7
    %v409 = vsub.s32 %v320, %v408
    %v410 = vrot.slane %v179, %v409
    %v411 = vsel %vm325, %v410, %v406
    %v412 = vlaneseq
    %v413 = vshrl.u32 %v412, 7
    %v414 = vsub.s32 %v327, %v413
    %v415 = vrot.slane %v182, %v414
    %v416 = vsel %vm332, %v415, %v411
    %v417 = vlaneseq
    %v418 = vshrl.u32 %v417, 7
    %v419 = vsub.s32 %v334, %v418
    %v420 = vrot.slane %v185, %v419
    %v421 = vsel %vm339, %v420, %v416
    %v422 = vlaneseq
    %v423 = vshrl.u32 %v422, 7
    %v424 = vsub.s32 %v341, %v423
    %v425 = vrot.slane %v188, %v424
    %v426 = vsel %vm346, %v425, %v421
    %vm427 = vcmask 1041409
    %v428 = vsel %vm427, %v426, %v347
    %430 = vmatprep.subr.mxu0 0.0
    %431 = vmatpush1.msra.mxu0 %v189
    %432 = vmatprep.subr.mxu0 0.0
    %433 = vmatpush1.msra.mxu0 %v190
    %434 = vmatprep.subr.mxu0 0.0
    %435 = vmatpush1.msra.mxu0 %v191
    %436 = vmatprep.subr.mxu0 0.0
    %437 = vmatpush1.msra.mxu0 %v192
    %438 = vmatprep.subr.mxu0 0.0
    %439 = vmatpush1.msra.mxu0 %v193
    %440 = vmatprep.subr.mxu0 0.0
    %441 = vmatpush1.msra.mxu0 %v194
    %442 = vmatprep.subr.mxu0 0.0
    %443 = vmatpush1.msra.mxu0 %v195
    %444 = vmatprep.subr.mxu0 0.0
    %445 = vmatpush1.msra.mxu0 %v196
    %446 = vmatprep.subr.mxu0 0.0
    %447 = vmatpush1.msra.mxu0 %v197
    %448 = vmatprep.subr.mxu0 0.0
    %449 = vmatpush1.msra.mxu0 %v198
    %450 = vmatprep.subr.mxu0 0.0
    %451 = vmatpush1.msra.mxu0 %v199
    %452 = vmatprep.subr.mxu0 0.0
    %453 = vmatpush1.msra.mxu0 %v200
    %454 = vmatprep.subr.mxu0 0.0
    %455 = vmatpush1.msra.mxu0 %v201
    %456 = vmatprep.subr.mxu0 0.0
    %457 = vmatpush1.msra.mxu0 %v202
    %458 = vmatprep.subr.mxu0 0.0
    %459 = vmatpush1.msra.mxu0 %v203
    %460 = vmatprep.subr.mxu0 0.0
    %461 = vmatpush1.msra.mxu0 %v204
    %462 = vmatprep.subr.mxu0 0.0
    %463 = vmatpush1.msra.mxu0 0.0
    %464 = vmatprep.subr.mxu0 0.0
    %465 = vmatpush1.msra.mxu0 0.0
    %466 = vmatprep.subr.mxu0 0.0
    %467 = vmatpush1.msra.mxu0 0.0
    %468 = vmatprep.subr.mxu0 0.0
    %469 = vmatpush1.msra.mxu0 0.0
    %470 = vmatprep.subr.mxu0 0.0
    %471 = vmatpush1.msra.mxu0 0.0
    %472 = vmatprep.subr.mxu0 0.0
    %473 = vmatpush1.msra.mxu0 0.0
    %474 = vmatprep.subr.mxu0 0.0
    %475 = vmatpush1.msra.mxu0 0.0
    %476 = vmatprep.subr.mxu0 0.0
    %477 = vmatpush1.msra.mxu0 0.0
    %478 = vmatprep.subr.mxu0 0.0
    %479 = vmatpush1.msra.mxu0 0.0
    %480 = vmatprep.subr.mxu0 0.0
    %481 = vmatpush1.msra.mxu0 0.0
    %482 = vmatprep.subr.mxu0 0.0
    %483 = vmatpush1.msra.mxu0 0.0
    %484 = vmatprep.subr.mxu0 0.0
    %485 = vmatpush1.msra.mxu0 0.0
    %486 = vmatprep.subr.mxu0 0.0
    %487 = vmatpush1.msra.mxu0 0.0
    %488 = vmatprep.subr.mxu0 0.0
    %489 = vmatpush1.msra.mxu0 0.0
    %490 = vmatprep.subr.mxu0 0.0
    %491 = vmatpush1.msra.mxu0 0.0
    %492 = vmatprep.subr.mxu0 0.0
    %493 = vmatpush1.msra.mxu0 0.0
    %494 = vmatprep.mubr.f32.mxu0 0.0
    %495 = vmatmul.mubr.f32.gmra.mrb[0].mxu0 %v428
    %v496 = vpop.f32.mrb[0].mxu0
    %v497 = vadd.f32 0.0, %v496
    %v498 = vpop.f32.mrb[0].mxu0
    %499 = vdwg.mxu0
    %v500 = vmax.f32 %v497, 0.0
    %v501 = vld [vmem:[%s2] sm:$0xff]
    %vm502 = vcmask 64512
    %v504 = vsel %vm502, %v500, 0
    %506 = vmatprep.subr.mxu0 0.0
    %507 = vmatpush1.msra.mxu0 %v501
    %508 = vmatprep.subr.mxu0 0.0
    %509 = vmatpush1.msra.mxu0 0.0
    %510 = vmatprep.subr.mxu0 0.0
    %511 = vmatpush1.msra.mxu0 0.0
    %512 = vmatprep.subr.mxu0 0.0
    %513 = vmatpush1.msra.mxu0 0.0
    %514 = vmatprep.subr.mxu0 0.0
    %515 = vmatpush1.msra.mxu0 0.0
    %516 = vmatprep.subr.mxu0 0.0
    %517 = vmatpush1.msra.mxu0 0.0
    %518 = vmatprep.subr.mxu0 0.0
    %519 = vmatpush1.msra.mxu0 0.0
    %520 = vmatprep.subr.mxu0 0.0
    %521 = vmatpush1.msra.mxu0 0.0
    %522 = vmatprep.subr.mxu0 0.0
    %523 = vmatpush1.msra.mxu0 0.0
    %524 = vmatprep.subr.mxu0 0.0
    %525 = vmatpush1.msra.mxu0 0.0
    %526 = vmatprep.subr.mxu0 0.0
    %527 = vmatpush1.msra.mxu0 0.0
    %528 = vmatprep.subr.mxu0 0.0
    %529 = vmatpush1.msra.mxu0 0.0
    %530 = vmatprep.subr.mxu0 0.0
    %531 = vmatpush1.msra.mxu0 0.0
    %532 = vmatprep.subr.mxu0 0.0
    %533 = vmatpush1.msra.mxu0 0.0
    %534 = vmatprep.subr.mxu0 0.0
    %535 = vmatpush1.msra.mxu0 0.0
    %536 = vmatprep.subr.mxu0 0.0
    %537 = vmatpush1.msra.mxu0 0.0
    %538 = vmatprep.subr.mxu0 0.0
    %539 = vmatpush1.msra.mxu0 0.0
    %540 = vmatprep.subr.mxu0 0.0
    %541 = vmatpush1.msra.mxu0 0.0
    %542 = vmatprep.subr.mxu0 0.0
    %543 = vmatpush1.msra.mxu0 0.0
    %544 = vmatprep.subr.mxu0 0.0
    %545 = vmatpush1.msra.mxu0 0.0
    %546 = vmatprep.subr.mxu0 0.0
    %547 = vmatpush1.msra.mxu0 0.0
    %548 = vmatprep.subr.mxu0 0.0
    %549 = vmatpush1.msra.mxu0 0.0
    %550 = vmatprep.subr.mxu0 0.0
    %551 = vmatpush1.msra.mxu0 0.0
    %552 = vmatprep.subr.mxu0 0.0
    %553 = vmatpush1.msra.mxu0 0.0
    %554 = vmatprep.subr.mxu0 0.0
    %555 = vmatpush1.msra.mxu0 0.0
    %556 = vmatprep.subr.mxu0 0.0
    %557 = vmatpush1.msra.mxu0 0.0
    %558 = vmatprep.subr.mxu0 0.0
    %559 = vmatpush1.msra.mxu0 0.0
    %560 = vmatprep.subr.mxu0 0.0
    %561 = vmatpush1.msra.mxu0 0.0
    %562 = vmatprep.subr.mxu0 0.0
    %563 = vmatpush1.msra.mxu0 0.0
    %564 = vmatprep.subr.mxu0 0.0
    %565 = vmatpush1.msra.mxu0 0.0
    %566 = vmatprep.subr.mxu0 0.0
    %567 = vmatpush1.msra.mxu0 0.0
    %568 = vmatprep.subr.mxu0 0.0
    %569 = vmatpush1.msra.mxu0 0.0
    %570 = vmatprep.mubr.f32.mxu0 0.0
    %571 = vmatmul.mubr.f32.gmra.mrb[0].mxu0 %v504
    %v572 = vpop.f32.mrb[0].mxu0
    %v573 = vadd.f32 0.0, %v572
    %v574 = vpop.f32.mrb[0].mxu0
    %575 = vdwg.mxu0
    %v576 = vxor.u32 %v573, 2147483648
    %v577 = vmul.f32 %v576, 1.442695
    %v578 = vpow.pop %v577
    %v579 = vadd.f32 %v578, 1.0
    %v580 = vrcp.pop %v579
    %v581 = vmul.f32 1.0, %v580
    %v582 = vlaneseq
    %v583 = vshrl.u32 %v582, 7
    %v584 = vsub.s32 0, %v583
    %v585 = vrot.slane %v581, %v584
    %587 = vbcast.lane.b32.xlu0 %v585, 256
    %v588 = vpop.permute.xlu0 %587
    %s590 = sor.u32 256, 8
    %591 = vbcast.lane.b32.xlu0 %v585, %s590
    %v592 = vpop.permute.xlu0 %591
    %s594 = sor.u32 256, 16
    %595 = vbcast.lane.b32.xlu0 %v585, %s594
    %v596 = vpop.permute.xlu0 %595
    %s598 = sor.u32 256, 24
    %599 = vbcast.lane.b32.xlu0 %v585, %s598
    %v600 = vpop.permute.xlu0 %599
    %s602 = sor.u32 256, 32
    %603 = vbcast.lane.b32.xlu0 %v585, %s602
    %v604 = vpop.permute.xlu0 %603
    %s606 = sor.u32 256, 40
    %607 = vbcast.lane.b32.xlu0 %v585, %s606
    %v608 = vpop.permute.xlu0 %607
    %s610 = sor.u32 256, 48
    %611 = vbcast.lane.b32.xlu0 %v585, %s610
    %v612 = vpop.permute.xlu0 %611
    %s614 = sor.u32 256, 56
    %615 = vbcast.lane.b32.xlu0 %v585, %s614
    %v616 = vpop.permute.xlu0 %615
    %s618 = sor.u32 256, 64
    %619 = vbcast.lane.b32.xlu0 %v585, %s618
    %v620 = vpop.permute.xlu0 %619
    %s622 = sor.u32 256, 72
    %623 = vbcast.lane.b32.xlu0 %v585, %s622
    %v624 = vpop.permute.xlu0 %623
    %s626 = sor.u32 256, 80
    %627 = vbcast.lane.b32.xlu0 %v585, %s626
    %v628 = vpop.permute.xlu0 %627
    %s630 = sor.u32 256, 88
    %631 = vbcast.lane.b32.xlu0 %v585, %s630
    %v632 = vpop.permute.xlu0 %631
    %s634 = sor.u32 256, 96
    %635 = vbcast.lane.b32.xlu0 %v585, %s634
    %v636 = vpop.permute.xlu0 %635
    %s638 = sor.u32 256, 104
    %639 = vbcast.lane.b32.xlu0 %v585, %s638
    %v640 = vpop.permute.xlu0 %639
    %s642 = sor.u32 256, 112
    %643 = vbcast.lane.b32.xlu0 %v585, %s642
    %v644 = vpop.permute.xlu0 %643
    %s646 = sor.u32 256, 120
    %647 = vbcast.lane.b32.xlu0 %v585, %s646
    %v648 = vpop.permute.xlu0 %647
    %v649 = vlaneseq
    %v650 = vshrl.u32 %v649, 7
    %v651 = vsub.s32 1, %v650
    %v652 = vrot.slane %v581, %v651
    %654 = vbcast.lane.b32.xlu0 %v652, 256
    %v655 = vpop.permute.xlu0 %654
    %s657 = sor.u32 256, 8
    %658 = vbcast.lane.b32.xlu0 %v652, %s657
    %v659 = vpop.permute.xlu0 %658
    %s661 = sor.u32 256, 16
    %662 = vbcast.lane.b32.xlu0 %v652, %s661
    %v663 = vpop.permute.xlu0 %662
    %s665 = sor.u32 256, 24
    %666 = vbcast.lane.b32.xlu0 %v652, %s665
    %v667 = vpop.permute.xlu0 %666
    %s669 = sor.u32 256, 32
    %670 = vbcast.lane.b32.xlu0 %v652, %s669
    %v671 = vpop.permute.xlu0 %670
    %s673 = sor.u32 256, 40
    %674 = vbcast.lane.b32.xlu0 %v652, %s673
    %v675 = vpop.permute.xlu0 %674
    %s677 = sor.u32 256, 48
    %678 = vbcast.lane.b32.xlu0 %v652, %s677
    %v679 = vpop.permute.xlu0 %678
    %s681 = sor.u32 256, 56
    %682 = vbcast.lane.b32.xlu0 %v652, %s681
    %v683 = vpop.permute.xlu0 %682
    %s685 = sor.u32 256, 64
    %686 = vbcast.lane.b32.xlu0 %v652, %s685
    %v687 = vpop.permute.xlu0 %686
    %s689 = sor.u32 256, 72
    %690 = vbcast.lane.b32.xlu0 %v652, %s689
    %v691 = vpop.permute.xlu0 %690
    %s693 = sor.u32 256, 80
    %694 = vbcast.lane.b32.xlu0 %v652, %s693
    %v695 = vpop.permute.xlu0 %694
    %s697 = sor.u32 256, 88
    %698 = vbcast.lane.b32.xlu0 %v652, %s697
    %v699 = vpop.permute.xlu0 %698
    %s701 = sor.u32 256, 96
    %702 = vbcast.lane.b32.xlu0 %v652, %s701
    %v703 = vpop.permute.xlu0 %702
    %s705 = sor.u32 256, 104
    %706 = vbcast.lane.b32.xlu0 %v652, %s705
    %v707 = vpop.permute.xlu0 %706
    %s709 = sor.u32 256, 112
    %710 = vbcast.lane.b32.xlu0 %v652, %s709
    %v711 = vpop.permute.xlu0 %710
    %s713 = sor.u32 256, 120
    %714 = vbcast.lane.b32.xlu0 %v652, %s713
    %v715 = vpop.permute.xlu0 %714
    %v716 = vmul.f32 %v29, %v588
    %v717 = vmul.f32 %v30, %v588
    %v718 = vmul.f32 %v31, %v592
    %v719 = vmul.f32 %v32, %v592
    %v720 = vmul.f32 %v33, %v596
    %v721 = vmul.f32 %v34, %v596
    %v722 = vmul.f32 %v35, %v600
    %v723 = vmul.f32 %v36, %v600
    %v724 = vmul.f32 %v37, %v604
    %v725 = vmul.f32 %v38, %v604
    %v726 = vmul.f32 %v39, %v608
    %v727 = vmul.f32 %v40, %v608
    %v728 = vmul.f32 %v41, %v612
    %v729 = vmul.f32 %v42, %v612
    %v730 = vmul.f32 %v43, %v616
    %v731 = vmul.f32 %v44, %v616
    %v732 = vmul.f32 %v45, %v620
    %v733 = vmul.f32 %v46, %v620
    %v734 = vmul.f32 %v47, %v624
    %v735 = vmul.f32 %v48, %v624
    %v736 = vmul.f32 %v49, %v628
    %v737 = vmul.f32 %v50, %v628
    %v738 = vmul.f32 %v51, %v632
    %v739 = vmul.f32 %v52, %v632
    %v740 = vmul.f32 %v53, %v636
    %v741 = vmul.f32 %v54, %v636
    %v742 = vmul.f32 %v55, %v640
    %v743 = vmul.f32 %v56, %v640
    %v744 = vmul.f32 %v57, %v644
    %v745 = vmul.f32 %v58, %v644
    %v746 = vmul.f32 %v59, %v648
    %v747 = vmul.f32 %v60, %v648
    %v748 = vmul.f32 %v61, %v655
    %v749 = vmul.f32 %v62, %v655
    %v750 = vmul.f32 %v63, %v659
    %v751 = vmul.f32 %v64, %v659
    %v752 = vmul.f32 %v65, %v663
    %v753 = vmul.f32 %v66, %v663
    %v754 = vmul.f32 %v67, %v667
    %v755 = vmul.f32 %v68, %v667
    %v756 = vmul.f32 %v69, %v671
    %v757 = vmul.f32 %v70, %v671
    %v758 = vmul.f32 %v71, %v675
    %v759 = vmul.f32 %v72, %v675
    %v760 = vmul.f32 %v73, %v679
    %v761 = vmul.f32 %v74, %v679
    %v762 = vmul.f32 %v75, %v683
    %v763 = vmul.f32 %v76, %v683
    %v764 = vmul.f32 %v77, %v687
    %v765 = vmul.f32 %v78, %v687
    %v766 = vmul.f32 %v79, %v691
    %v767 = vmul.f32 %v80, %v691
    %v768 = vmul.f32 %v81, %v695
    %v769 = vmul.f32 %v82, %v695
    %v770 = vmul.f32 %v83, %v699
    %v771 = vmul.f32 %v84, %v699
    %v772 = vmul.f32 %v85, %v703
    %v773 = vmul.f32 %v86, %v703
    %v774 = vmul.f32 %v87, %v707
    %v775 = vmul.f32 %v88, %v707
    %v776 = vmul.f32 %v89, %v711
    %v777 = vmul.f32 %v90, %v711
    %v778 = vmul.f32 %v91, %v715
    %v779 = vmul.f32 %v92, %v715
    %780 = vst [vmem:[#allocation5] sm:$0xff] %v716
    %781 = vst [vmem:[#allocation5 + $0x8] sm:$0xff] %v717
    %782 = vst [vmem:[#allocation5 + $0x10] sm:$0xff] %v718
    %783 = vst [vmem:[#allocation5 + $0x18] sm:$0xff] %v719
    %784 = vst [vmem:[#allocation5 + $0x20] sm:$0xff] %v720
    %785 = vst [vmem:[#allocation5 + $0x28] sm:$0xff] %v721
    %786 = vst [vmem:[#allocation5 + $0x30] sm:$0xff] %v722
    %787 = vst [vmem:[#allocation5 + $0x38] sm:$0xff] %v723
    %788 = vst [vmem:[#allocation5 + $0x40] sm:$0xff] %v724
    %789 = vst [vmem:[#allocation5 + $0x48] sm:$0xff] %v725
    %790 = vst [vmem:[#allocation5 + $0x50] sm:$0xff] %v726
    %791 = vst [vmem:[#allocation5 + $0x58] sm:$0xff] %v727
    %792 = vst [vmem:[#allocation5 + $0x60] sm:$0xff] %v728
    %793 = vst [vmem:[#allocation5 + $0x68] sm:$0xff] %v729
    %794 = vst [vmem:[#allocation5 + $0x70] sm:$0xff] %v730
    %795 = vst [vmem:[#allocation5 + $0x78] sm:$0xff] %v731
    %796 = vst [vmem:[#allocation5 + $0x80] sm:$0xff] %v732
    %797 = vst [vmem:[#allocation5 + $0x88] sm:$0xff] %v733
    %798 = vst [vmem:[#allocation5 + $0x90] sm:$0xff] %v734
    %799 = vst [vmem:[#allocation5 + $0x98] sm:$0xff] %v735
    %800 = vst [vmem:[#allocation5 + $0xa0] sm:$0xff] %v736
    %801 = vst [vmem:[#allocation5 + $0xa8] sm:$0xff] %v737
    %802 = vst [vmem:[#allocation5 + $0xb0] sm:$0xff] %v738
    %803 = vst [vmem:[#allocation5 + $0xb8] sm:$0xff] %v739
    %804 = vst [vmem:[#allocation5 + $0xc0] sm:$0xff] %v740
    %805 = vst [vmem:[#allocation5 + $0xc8] sm:$0xff] %v741
    %806 = vst [vmem:[#allocation5 + $0xd0] sm:$0xff] %v742
    %807 = vst [vmem:[#allocation5 + $0xd8] sm:$0xff] %v743
    %808 = vst [vmem:[#allocation5 + $0xe0] sm:$0xff] %v744
    %809 = vst [vmem:[#allocation5 + $0xe8] sm:$0xff] %v745
    %810 = vst [vmem:[#allocation5 + $0xf0] sm:$0xff] %v746
    %811 = vst [vmem:[#allocation5 + $0xf8] sm:$0xff] %v747
    %812 = vst [vmem:[#allocation5 + $0x100] sm:$0xff] %v748
    %813 = vst [vmem:[#allocation5 + $0x108] sm:$0xff] %v749
    %814 = vst [vmem:[#allocation5 + $0x110] sm:$0xff] %v750
    %815 = vst [vmem:[#allocation5 + $0x118] sm:$0xff] %v751
    %816 = vst [vmem:[#allocation5 + $0x120] sm:$0xff] %v752
    %817 = vst [vmem:[#allocation5 + $0x128] sm:$0xff] %v753
    %818 = vst [vmem:[#allocation5 + $0x130] sm:$0xff] %v754
    %819 = vst [vmem:[#allocation5 + $0x138] sm:$0xff] %v755
    %820 = vst [vmem:[#allocation5 + $0x140] sm:$0xff] %v756
    %821 = vst [vmem:[#allocation5 + $0x148] sm:$0xff] %v757
    %822 = vst [vmem:[#allocation5 + $0x150] sm:$0xff] %v758
    %823 = vst [vmem:[#allocation5 + $0x158] sm:$0xff] %v759
    %824 = vst [vmem:[#allocation5 + $0x160] sm:$0xff] %v760
    %825 = vst [vmem:[#allocation5 + $0x168] sm:$0xff] %v761
    %826 = vst [vmem:[#allocation5 + $0x170] sm:$0xff] %v762
    %827 = vst [vmem:[#allocation5 + $0x178] sm:$0xff] %v763
    %828 = vst [vmem:[#allocation5 + $0x180] sm:$0xff] %v764
    %829 = vst [vmem:[#allocation5 + $0x188] sm:$0xff] %v765
    %830 = vst [vmem:[#allocation5 + $0x190] sm:$0xff] %v766
    %831 = vst [vmem:[#allocation5 + $0x198] sm:$0xff] %v767
    %832 = vst [vmem:[#allocation5 + $0x1a0] sm:$0xff] %v768
    %833 = vst [vmem:[#allocation5 + $0x1a8] sm:$0xff] %v769
    %834 = vst [vmem:[#allocation5 + $0x1b0] sm:$0xff] %v770
    %835 = vst [vmem:[#allocation5 + $0x1b8] sm:$0xff] %v771
    %836 = vst [vmem:[#allocation5 + $0x1c0] sm:$0xff] %v772
    %837 = vst [vmem:[#allocation5 + $0x1c8] sm:$0xff] %v773
    %838 = vst [vmem:[#allocation5 + $0x1d0] sm:$0xff] %v774
    %839 = vst [vmem:[#allocation5 + $0x1d8] sm:$0xff] %v775
    %840 = vst [vmem:[#allocation5 + $0x1e0] sm:$0xff] %v776
    %841 = vst [vmem:[#allocation5 + $0x1e8] sm:$0xff] %v777
    %842 = vst [vmem:[#allocation5 + $0x1f0] sm:$0xff] %v778
    %843 = vst [vmem:[#allocation5 + $0x1f8] sm:$0xff] %v779
    // Predicated region
    $region18: #{tpu_custom_call.1} parent=1 // pred_check
      _
    $region19: #{tpu_custom_call.1} parent=1 // pred_check_branch
      %845 = sbr.rel (0) target = $region21
    $region20: #{tpu_custom_call.1} parent=1 // pred_region
      %s847 = ssub.s32 8192, 8192
      %848 = vsyncadd [#allocation4], %s847
      %s849 = sshll.u32 [#allocation5], 4
      %s850 = int_to_ptr.vmem [resolvable:$true] %s849
      %855 = dma.vmem_to_hbm [thread:$0]  %s850, 8192, %s3, [#allocation4], 256, 256, 16
    $region21: #{tpu_custom_call.1} parent=1 // pred_fallthru
      _
    // Predicated region
    $region22: #{tpu_custom_call.1} parent=1 // pred_check
      _
    $region23: #{tpu_custom_call.1} parent=1 // pred_check_branch
      %857 = sbr.rel (0) target = $region25
    $region24: #{tpu_custom_call.1} parent=1 // pred_region
      %858 = dma.done [#allocation4], 8192
    $region25: #{tpu_custom_call.1} parent=1 // pred_fallthru
      _
    %859 = vsyncpa [#allocation3], 1
    %860 = vsyncpa [#allocation4], 1

</llo_original>
